<compile_context>
chip_gen: v7x
topology: tpu7x:2x2x1
jax: 0.10.0
libtpu: 0.0.40
codegen_flags: <defaults>
</compile_context>

<pallas_src>
import jax
import jax.numpy as jnp
import numpy as np
from jax.experimental import pallas as pl
from jax.experimental.pallas import tpu as pltpu

LEAKY_SLOPE = 0.01            # torch.nn.LeakyReLU default negative_slope
WEIGHTS_FINAL_INIT = 0.003

_LANE = 128
_SUBLANE = 8
_MAX_BATCH_TILE = 512         # comfortably inside v7x's 64 MiB VMEM with 2x buffering


def _round_up(n, m):
    return ((n + m - 1) // m) * m


def _actor_kernel(x_ref, w1_ref, b1_ref, w2_ref, b2_ref, w3_ref, b3_ref, o_ref):
    # Layer 1: bf16 MXU matmul, f32 accumulate + epilogue.
    h = jnp.dot(x_ref[...], w1_ref[...], preferred_element_type=jnp.float32)
    h = h + b1_ref[...]
    h = jnp.maximum(h, LEAKY_SLOPE * h)          # LeakyReLU: single VALU op

    # Layer 2
    h = jnp.dot(h.astype(jnp.bfloat16), w2_ref[...],
                preferred_element_type=jnp.float32)
    h = h + b2_ref[...]
    h = jnp.maximum(h, LEAKY_SLOPE * h)

    # Output layer + sigmoid. exp and approx reciprocal both run on the EUP
    # slot, keeping the VALU free in this short epilogue.
    h = jnp.dot(h.astype(jnp.bfloat16), w3_ref[...],
                preferred_element_type=jnp.float32)
    h = h + b3_ref[...]
    o_ref[...] = pl.reciprocal(1.0 + jnp.exp(-h), approx=True).astype(o_ref.dtype)


@jax.jit
def actor_forward(x, w1, b1, w2, b2, w3, b3):
    batch, in_dim = x.shape
    h0 = w1.shape[1]
    h1 = w2.shape[1]
    action_dim = w3.shape[1]

    # Lane-dense feature padding (exact, see header comment).
    H0 = _round_up(h0, _LANE)
    H1 = _round_up(h1, _LANE)
    OUT = _round_up(action_dim, _LANE)

    # Batch tiling: large tiles amortize the per-step Pallas overhead; the
    # batch axis is the only gridded axis and is "parallel".
    tb = min(_round_up(batch, _SUBLANE), _MAX_BATCH_TILE)
    b_pad = _round_up(batch, tb)
    n_tiles = b_pad // tb

    xp = x
    if b_pad != batch:
        xp = jnp.pad(x, ((0, b_pad - batch), (0, 0)))
    xp = xp.astype(jnp.bfloat16)

    def pad2(a, rows, cols):
        r, c = a.shape
        if r == rows and c == cols:
            return a
        return jnp.pad(a, ((0, rows - r), (0, cols - c)))

    # Weights in bf16 for the MXU; biases stay f32 (bias add done in f32).
    w1p = pad2(w1, in_dim, H0).astype(jnp.bfloat16)
    w2p = pad2(w2, H0, H1).astype(jnp.bfloat16)
    w3p = pad2(w3, H1, OUT).astype(jnp.bfloat16)
    b1p = pad2(b1, 1, H0).astype(jnp.float32)
    b2p = pad2(b2, 1, H1).astype(jnp.float32)
    b3p = pad2(b3, 1, OUT).astype(jnp.float32)

    flops = 2 * b_pad * (in_dim * H0 + H0 * H1 + H1 * OUT)
    bytes_accessed = (xp.size * 2
                      + (w1p.size + w2p.size + w3p.size) * 2
                      + (b1p.size + b2p.size + b3p.size) * 4
                      + b_pad * OUT * 4)
    cost = pl.CostEstimate(flops=flops,
                           transcendentals=b_pad * OUT,
                           bytes_accessed=bytes_accessed)

    # Weights/biases: constant index_map -> VMEM-resident across grid steps.
    const = lambda shape: pl.BlockSpec(shape, lambda b: (0, 0))

    out = pl.pallas_call(
        _actor_kernel,
        out_shape=jax.ShapeDtypeStruct((b_pad, OUT), jnp.float32),
        grid_spec=pltpu.PrefetchScalarGridSpec(
            num_scalar_prefetch=0,
            grid=(n_tiles,),
            in_specs=[
                pl.BlockSpec((tb, in_dim), lambda b: (b, 0)),
                const((in_dim, H0)), const((1, H0)),
                const((H0, H1)), const((1, H1)),
                const((H1, OUT)), const((1, OUT)),
            ],
            out_specs=pl.BlockSpec((tb, OUT), lambda b: (b, 0)),
        ),
        compiler_params=pltpu.CompilerParams(
            dimension_semantics=("parallel",),
        ),
        cost_estimate=cost,
    )(xp, w1p, b1p, w2p, b2p, w3p, b3p)

    return out[:batch, :action_dim]


def make_actor_params(key, input_size, action_dim, hidden_layers):
    """Deterministic init mirroring the PyTorch module's init scheme.

    fan_in_uniform_init: U(-1/sqrt(fan_in), 1/sqrt(fan_in)) for fc_1 layers
    (fan_in = in_features). Final layer: U(-0.003, 0.003).
    Weights are stored as [in_features, out_features] (transposed vs PyTorch).
    """
    k1w, k1b, k2w, k2b, k3w, k3b = jax.random.split(key, 6)
    h0, h1 = hidden_layers

    def u(k, shape, bound):
        return jax.random.uniform(k, shape, jnp.float32, -bound, bound)

    w1 = u(k1w, (input_size, h0), 1.0 / np.sqrt(input_size))
    b1 = u(k1b, (1, h0), 1.0 / np.sqrt(input_size))
    w2 = u(k2w, (h0, h1), 1.0 / np.sqrt(h0))
    b2 = u(k2b, (1, h1), 1.0 / np.sqrt(h0))
    w3 = u(k3w, (h1, action_dim), WEIGHTS_FINAL_INIT)
    b3 = u(k3b, (1, action_dim), WEIGHTS_FINAL_INIT)
    return w1, b1, w2, b2, w3, b3


def actor_reference(x, w1, b1, w2, b2, w3, b3):
    """Pure-JAX f32 reference for correctness checking."""
    h = x @ w1 + b1
    h = jnp.where(h >= 0.0, h, LEAKY_SLOPE * h)
    h = h @ w2 + b2
    h = jnp.where(h >= 0.0, h, LEAKY_SLOPE * h)
    h = h @ w3 + b3
    return jax.nn.sigmoid(h)


if __name__ == "__main__":
    key = jax.random.PRNGKey(0)
    kx, kp = jax.random.split(key)

    batch = 8
    input_size = 16
    hidden_layers = (32, 32)
    action_dim = 4

    x = jax.random.normal(kx, (batch, input_size), jnp.float32)
    params = make_actor_params(kp, input_size, action_dim, hidden_layers)

    out = actor_forward(x, *params)
    out = jax.block_until_ready(out)
    assert out.shape == (batch, action_dim)

    ref = actor_reference(x, *params)
    # bf16 MXU operands + EUP approx reciprocal -> relaxed tolerance vs the
    # f32 reference; sigmoid outputs live near 0.5 so this is generous.
    np.testing.assert_allclose(np.asarray(out), np.asarray(ref),
                               rtol=1e-2, atol=1e-2)

    print("KERNEL_OK")
</pallas_src>

<mosaic_0001>
module attributes {stable_mosaic.version = 11 : i64} {
  func.func @_actor_kernel(%arg0: i32, %arg1: memref<8x16xbf16, #tpu.memory_space<vmem>>, %arg2: memref<16x128xbf16, #tpu.memory_space<vmem>>, %arg3: memref<1x128xf32, #tpu.memory_space<vmem>>, %arg4: memref<128x128xbf16, #tpu.memory_space<vmem>>, %arg5: memref<1x128xf32, #tpu.memory_space<vmem>>, %arg6: memref<128x128xbf16, #tpu.memory_space<vmem>>, %arg7: memref<1x128xf32, #tpu.memory_space<vmem>>, %arg8: memref<8x128xf32, #tpu.memory_space<vmem>>) attributes {dimension_semantics = [#tpu.dimension_semantics<parallel>], iteration_bounds = array<i64: 1>, scalar_prefetch = 0 : i64, scratch_operands = 0 : i64, tpu.core_type = #tpu.core_type<tc>, window_params = [{transform_indices = @transform_0, window_bounds = array<i64: 8, 16>}, {pipeline_mode = #tpu.pipeline_mode<synchronous>, transform_indices = @transform_1, window_bounds = array<i64: 16, 128>}, {pipeline_mode = #tpu.pipeline_mode<synchronous>, transform_indices = @transform_2, window_bounds = array<i64: 1, 128>}, {pipeline_mode = #tpu.pipeline_mode<synchronous>, transform_indices = @transform_3, window_bounds = array<i64: 128, 128>}, {pipeline_mode = #tpu.pipeline_mode<synchronous>, transform_indices = @transform_4, window_bounds = array<i64: 1, 128>}, {pipeline_mode = #tpu.pipeline_mode<synchronous>, transform_indices = @transform_5, window_bounds = array<i64: 128, 128>}, {pipeline_mode = #tpu.pipeline_mode<synchronous>, transform_indices = @transform_6, window_bounds = array<i64: 1, 128>}, {transform_indices = @transform_7, window_bounds = array<i64: 8, 128>}]} {
    %c0 = arith.constant 0 : index
    %c0_0 = arith.constant 0 : index
    %0 = vector.load %arg1[%c0, %c0_0] : memref<8x16xbf16, #tpu.memory_space<vmem>>, vector<8x16xbf16>
    %c0_1 = arith.constant 0 : index
    %c0_2 = arith.constant 0 : index
    %1 = vector.load %arg2[%c0_1, %c0_2] : memref<16x128xbf16, #tpu.memory_space<vmem>>, vector<16x128xbf16>
    %cst = arith.constant dense<0.000000e+00> : vector<8x128xf32>
    %2 = tpu.matmul %0, %1, %cst {dimension_numbers = #tpu.dot_dimension_numbers<[1], [0], [0], [1], [0, 0, 1, 1], [], []>} : vector<8x16xbf16>, vector<16x128xbf16>, vector<8x128xf32> -> vector<8x128xf32>
    %c0_3 = arith.constant 0 : index
    %c0_4 = arith.constant 0 : index
    %3 = vector.load %arg3[%c0_3, %c0_4] : memref<1x128xf32, #tpu.memory_space<vmem>>, vector<1x128xf32>
    %4 = vector.broadcast %3 : vector<1x128xf32> to vector<8x128xf32>
    %5 = arith.addf %2, %4 : vector<8x128xf32>
    %cst_5 = arith.constant 0.00999999977 : f32
    %6 = vector.broadcast %cst_5 : f32 to vector<8x128xf32>
    %7 = arith.mulf %6, %5 : vector<8x128xf32>
    %8 = arith.maximumf %5, %7 : vector<8x128xf32>
    %9 = arith.truncf %8 : vector<8x128xf32> to vector<8x128xbf16>
    %c0_6 = arith.constant 0 : index
    %c0_7 = arith.constant 0 : index
    %10 = vector.load %arg4[%c0_6, %c0_7] : memref<128x128xbf16, #tpu.memory_space<vmem>>, vector<128x128xbf16>
    %cst_8 = arith.constant dense<0.000000e+00> : vector<8x128xf32>
    %11 = tpu.matmul %9, %10, %cst_8 {dimension_numbers = #tpu.dot_dimension_numbers<[1], [0], [0], [1], [0, 0, 1, 1], [], []>} : vector<8x128xbf16>, vector<128x128xbf16>, vector<8x128xf32> -> vector<8x128xf32>
    %c0_9 = arith.constant 0 : index
    %c0_10 = arith.constant 0 : index
    %12 = vector.load %arg5[%c0_9, %c0_10] : memref<1x128xf32, #tpu.memory_space<vmem>>, vector<1x128xf32>
    %13 = vector.broadcast %12 : vector<1x128xf32> to vector<8x128xf32>
    %14 = arith.addf %11, %13 : vector<8x128xf32>
    %cst_11 = arith.constant 0.00999999977 : f32
    %15 = vector.broadcast %cst_11 : f32 to vector<8x128xf32>
    %16 = arith.mulf %15, %14 : vector<8x128xf32>
    %17 = arith.maximumf %14, %16 : vector<8x128xf32>
    %18 = arith.truncf %17 : vector<8x128xf32> to vector<8x128xbf16>
    %c0_12 = arith.constant 0 : index
    %c0_13 = arith.constant 0 : index
    %19 = vector.load %arg6[%c0_12, %c0_13] : memref<128x128xbf16, #tpu.memory_space<vmem>>, vector<128x128xbf16>
    %cst_14 = arith.constant dense<0.000000e+00> : vector<8x128xf32>
    %20 = tpu.matmul %18, %19, %cst_14 {dimension_numbers = #tpu.dot_dimension_numbers<[1], [0], [0], [1], [0, 0, 1, 1], [], []>} : vector<8x128xbf16>, vector<128x128xbf16>, vector<8x128xf32> -> vector<8x128xf32>
    %c0_15 = arith.constant 0 : index
    %c0_16 = arith.constant 0 : index
    %21 = vector.load %arg7[%c0_15, %c0_16] : memref<1x128xf32, #tpu.memory_space<vmem>>, vector<1x128xf32>
    %22 = vector.broadcast %21 : vector<1x128xf32> to vector<8x128xf32>
    %23 = arith.addf %20, %22 : vector<8x128xf32>
    %cst_17 = arith.constant 0.000000e+00 : f32
    %24 = vector.broadcast %cst_17 : f32 to vector<8x128xf32>
    %25 = arith.subf %24, %23 : vector<8x128xf32>
    %26 = math.exp %25 : vector<8x128xf32>
    %cst_18 = arith.constant 1.000000e+00 : f32
    %27 = vector.broadcast %cst_18 : f32 to vector<8x128xf32>
    %28 = arith.addf %27, %26 : vector<8x128xf32>
    %29 = tpu.reciprocal %28 {approx = true} : vector<8x128xf32> -> vector<8x128xf32>
    %c0_19 = arith.constant 0 : index
    %c0_20 = arith.constant 0 : index
    %30 = vector.load %arg8[%c0_19, %c0_20] : memref<8x128xf32, #tpu.memory_space<vmem>>, vector<8x128xf32>
    tpu.vector_store %arg8[%c0_19, %c0_20], %29 {strides = array<i32>} : memref<8x128xf32, #tpu.memory_space<vmem>>, vector<8x128xf32>,
    return
  }
  func.func @transform_0(%arg0: i32) -> (i32, i32) {
    %c0_i32 = arith.constant 0 : i32
    %c0_i32_0 = arith.constant 0 : i32
    return %arg0, %c0_i32 : i32, i32
  }
  func.func @transform_1(%arg0: i32) -> (i32, i32) {
    %c0_i32 = arith.constant 0 : i32
    %c0_i32_0 = arith.constant 0 : i32
    %c0_i32_1 = arith.constant 0 : i32
    return %c0_i32, %c0_i32_0 : i32, i32
  }
  func.func @transform_2(%arg0: i32) -> (i32, i32) {
    %c0_i32 = arith.constant 0 : i32
    %c0_i32_0 = arith.constant 0 : i32
    %c0_i32_1 = arith.constant 0 : i32
    return %c0_i32, %c0_i32_0 : i32, i32
  }
  func.func @transform_3(%arg0: i32) -> (i32, i32) {
    %c0_i32 = arith.constant 0 : i32
    %c0_i32_0 = arith.constant 0 : i32
    %c0_i32_1 = arith.constant 0 : i32
    return %c0_i32, %c0_i32_0 : i32, i32
  }
  func.func @transform_4(%arg0: i32) -> (i32, i32) {
    %c0_i32 = arith.constant 0 : i32
    %c0_i32_0 = arith.constant 0 : i32
    %c0_i32_1 = arith.constant 0 : i32
    return %c0_i32, %c0_i32_0 : i32, i32
  }
  func.func @transform_5(%arg0: i32) -> (i32, i32) {
    %c0_i32 = arith.constant 0 : i32
    %c0_i32_0 = arith.constant 0 : i32
    %c0_i32_1 = arith.constant 0 : i32
    return %c0_i32, %c0_i32_0 : i32, i32
  }
  func.func @transform_6(%arg0: i32) -> (i32, i32) {
    %c0_i32 = arith.constant 0 : i32
    %c0_i32_0 = arith.constant 0 : i32
    %c0_i32_1 = arith.constant 0 : i32
    return %c0_i32, %c0_i32_0 : i32, i32
  }
  func.func @transform_7(%arg0: i32) -> (i32, i32) {
    %c0_i32 = arith.constant 0 : i32
    %c0_i32_0 = arith.constant 0 : i32
    return %arg0, %c0_i32 : i32, i32
  }
}

</mosaic_0001>

<llo_original>
// kernel: actor_forward.1
$region0: #{actor_forward.1}
  #allocation0 [shape = 'u32[]', space=smem, size = 0x4, offset = 0x4, fixed_abs, tag = 'smem constant byte address 0x4 - core index']
  #allocation1 [shape = 'u32[144,128]{1,0:T(1,128)}', space=vmem, size = 0x12000, scoped, tag = 'internal scratch']
  %s0 = inlined_call_operand.vmem [shape: bf16[8,16], index: 0, kind: input, shape index: {}]
  %s1 = inlined_call_operand.vmem [shape: bf16[16,128], index: 1, kind: input, shape index: {}]
  %s2 = inlined_call_operand.vmem [shape: f32[1,128], index: 2, kind: input, shape index: {}]
  %s3 = inlined_call_operand.vmem [shape: bf16[128,128], index: 3, kind: input, shape index: {}]
  %s4 = inlined_call_operand.vmem [shape: f32[1,128], index: 4, kind: input, shape index: {}]
  %s5 = inlined_call_operand.vmem [shape: bf16[128,128], index: 5, kind: input, shape index: {}]
  %s6 = inlined_call_operand.vmem [shape: f32[1,128], index: 6, kind: input, shape index: {}]
  %s7 = inlined_call_operand.vmem [shape: f32[8,128], index: 7, kind: output, shape index: {}]
  %s8 = sld [smem:[#allocation0]]
  $region38: #{actor_forward.1} parent=0
    _
  %s10 = ssub.s32 1, %s8
  %s11 = scalar_select 0, %s10, %s8
  // Predicated region
  $region2: #{actor_forward.1} parent=0 // pred_check
    _
  $region3: #{actor_forward.1} parent=0 // pred_check_branch
    %13 = sbr.rel (0) target = $region5
  $region4: #{actor_forward.1} parent=0 // pred_region
    _
  $region5: #{actor_forward.1} parent=0 // pred_fallthru
    _
  // Predicated region
  $region6: #{actor_forward.1} parent=0 // pred_check
    _
  $region7: #{actor_forward.1} parent=0 // pred_check_branch
    %15 = sbr.rel (0) target = $region9
  $region8: #{actor_forward.1} parent=0 // pred_region
    _
  $region9: #{actor_forward.1} parent=0 // pred_fallthru
    _
  // Predicated region
  $region10: #{actor_forward.1} parent=0 // pred_check
    _
  $region11: #{actor_forward.1} parent=0 // pred_check_branch
    %17 = sbr.rel (0) target = $region13
  $region12: #{actor_forward.1} parent=0 // pred_region
    _
  $region13: #{actor_forward.1} parent=0 // pred_fallthru
    _
  // Predicated region
  $region14: #{actor_forward.1} parent=0 // pred_check
    _
  $region15: #{actor_forward.1} parent=0 // pred_check_branch
    %19 = sbr.rel (0) target = $region17
  $region16: #{actor_forward.1} parent=0 // pred_region
    _
  $region17: #{actor_forward.1} parent=0 // pred_fallthru
    _
  // Predicated region
  $region18: #{actor_forward.1} parent=0 // pred_check
    _
  $region19: #{actor_forward.1} parent=0 // pred_check_branch
    %21 = sbr.rel (0) target = $region21
  $region20: #{actor_forward.1} parent=0 // pred_region
    _
  $region21: #{actor_forward.1} parent=0 // pred_fallthru
    _
  // Predicated region
  $region22: #{actor_forward.1} parent=0 // pred_check
    _
  $region23: #{actor_forward.1} parent=0 // pred_check_branch
    %23 = sbr.rel (0) target = $region25
  $region24: #{actor_forward.1} parent=0 // pred_region
    _
  $region25: #{actor_forward.1} parent=0 // pred_fallthru
    _
  // Predicated region
  $region26: #{actor_forward.1} parent=0 // pred_check
    _
  $region27: #{actor_forward.1} parent=0 // pred_check_branch
    %25 = sbr.rel (0) target = $region29
  $region28: #{actor_forward.1} parent=0 // pred_region
    _
  $region29: #{actor_forward.1} parent=0 // pred_fallthru
    _
  %v27 = vld [vmem:[%s0] sm:$0xf]
  %v28 = vld [vmem:[%s1] sm:$0xf]
  %v29 = vld [vmem:[%s1 + $0x4] sm:$0xf]
  %v30 = vld [vmem:[%s2] sm:$0x1]
  %v32 = vlaneseq
  %v33 = vshrl.u32 %v32, 7
  %v34 = vsub.s32 0, %v33
  %v35 = vrot.slane %v30, %v34
  %v39 = vunpack.c.l.b16 %v28
  %v40 = vunpack.c.l.b16 %v29
  %v41 = vpack.c.b16 %v40, %v39
  %vm43 = vcmask 130048
  %v45 = vsel %vm43, %v27, 0
  %47 = vmatprep.subr.bf16.mxu0 0
  %48 = vmatpush1.bf16.msra.mxu0 %v41
  %49 = vmatprep.subr.bf16.mxu0 0
  %50 = vmatpush1.bf16.msra.mxu0 0
  %51 = vmatprep.subr.bf16.mxu0 0
  %52 = vmatpush1.bf16.msra.mxu0 0
  %53 = vmatprep.subr.bf16.mxu0 0
  %54 = vmatpush1.bf16.msra.mxu0 0
  %55 = vmatprep.subr.bf16.mxu0 0
  %56 = vmatpush1.bf16.msra.mxu0 0
  %57 = vmatprep.subr.bf16.mxu0 0
  %58 = vmatpush1.bf16.msra.mxu0 0
  %59 = vmatprep.subr.bf16.mxu0 0
  %60 = vmatpush1.bf16.msra.mxu0 0
  %61 = vmatprep.subr.bf16.mxu0 0
  %62 = vmatpush1.bf16.msra.mxu0 0
  %63 = vmatprep.subr.bf16.mxu0 0
  %64 = vmatpush1.bf16.msra.mxu0 0
  %65 = vmatprep.subr.bf16.mxu0 0
  %66 = vmatpush1.bf16.msra.mxu0 0
  %67 = vmatprep.subr.bf16.mxu0 0
  %68 = vmatpush1.bf16.msra.mxu0 0
  %69 = vmatprep.subr.bf16.mxu0 0
  %70 = vmatpush1.bf16.msra.mxu0 0
  %71 = vmatprep.subr.bf16.mxu0 0
  %72 = vmatpush1.bf16.msra.mxu0 0
  %73 = vmatprep.subr.bf16.mxu0 0
  %74 = vmatpush1.bf16.msra.mxu0 0
  %75 = vmatprep.subr.bf16.mxu0 0
  %76 = vmatpush1.bf16.msra.mxu0 0
  %77 = vmatprep.subr.bf16.mxu0 0
  %78 = vmatpush1.bf16.msra.mxu0 0
  %79 = vmatprep.mubr.bf16.mxu0 0
  %80 = vmatmul.mubr.bf16.gmra.mrb[0].mxu0 %v45
  %v81 = vpop.f32.mrb[0].mxu0
  %v82 = vadd.f32 %v35, %v81
  %v83 = vpop.f32.mrb[0].mxu0
  %v84 = vpop.f32.mrb[0].mxu0
  %v85 = vpop.f32.mrb[0].mxu0
  %86 = vdwg.mxu0
  %v87 = vmul.f32 %v82, 0.01
  %v88 = vmax.f32 %v82, %v87
  %v89 = vpack.c.bf16 %v88, %v88
  %v90 = vld [vmem:[%s3] sm:$0xf]
  %v91 = vld [vmem:[%s3 + $0x4] sm:$0xf]
  %v92 = vld [vmem:[%s3 + $0x8] sm:$0xf]
  %v93 = vld [vmem:[%s3 + $0xc] sm:$0xf]
  %v94 = vld [vmem:[%s3 + $0x10] sm:$0xf]
  %v95 = vld [vmem:[%s3 + $0x14] sm:$0xf]
  %v96 = vld [vmem:[%s3 + $0x18] sm:$0xf]
  %v97 = vld [vmem:[%s3 + $0x1c] sm:$0xf]
  %v98 = vld [vmem:[%s3 + $0x20] sm:$0xf]
  %v99 = vld [vmem:[%s3 + $0x24] sm:$0xf]
  %v100 = vld [vmem:[%s3 + $0x28] sm:$0xf]
  %v101 = vld [vmem:[%s3 + $0x2c] sm:$0xf]
  %v102 = vld [vmem:[%s3 + $0x30] sm:$0xf]
  %v103 = vld [vmem:[%s3 + $0x34] sm:$0xf]
  %v104 = vld [vmem:[%s3 + $0x38] sm:$0xf]
  %v105 = vld [vmem:[%s3 + $0x3c] sm:$0xf]
  %v106 = vld [vmem:[%s4] sm:$0x1]
  %v108 = vlaneseq
  %v109 = vshrl.u32 %v108, 7
  %v110 = vsub.s32 0, %v109
  %v111 = vrot.slane %v106, %v110
  %v129 = vunpack.c.l.b16 %v90
  %v130 = vunpack.c.l.b16 %v91
  %v131 = vunpack.c.l.b16 %v92
  %v132 = vunpack.c.l.b16 %v93
  %v133 = vunpack.c.l.b16 %v94
  %v134 = vunpack.c.l.b16 %v95
  %v135 = vunpack.c.l.b16 %v96
  %v136 = vunpack.c.l.b16 %v97
  %v137 = vunpack.c.l.b16 %v98
  %v138 = vunpack.c.l.b16 %v99
  %v139 = vunpack.c.l.b16 %v100
  %v140 = vunpack.c.l.b16 %v101
  %v141 = vunpack.c.l.b16 %v102
  %v142 = vunpack.c.l.b16 %v103
  %v143 = vunpack.c.l.b16 %v104
  %v144 = vunpack.c.l.b16 %v105
  %v145 = vpack.c.b16 %v130, %v129
  %v146 = vpack.c.b16 %v132, %v131
  %v147 = vpack.c.b16 %v134, %v133
  %v148 = vpack.c.b16 %v136, %v135
  %v149 = vpack.c.b16 %v138, %v137
  %v150 = vpack.c.b16 %v140, %v139
  %v151 = vpack.c.b16 %v142, %v141
  %v152 = vpack.c.b16 %v144, %v143
  %161 = vmatprep.subr.bf16.mxu0 0
  %162 = vmatpush1.bf16.msra.mxu0 %v145
  %163 = vmatprep.subr.bf16.mxu0 0
  %164 = vmatpush1.bf16.msra.mxu0 %v146
  %165 = vmatprep.subr.bf16.mxu0 0
  %166 = vmatpush1.bf16.msra.mxu0 %v147
  %167 = vmatprep.subr.bf16.mxu0 0
  %168 = vmatpush1.bf16.msra.mxu0 %v148
  %169 = vmatprep.subr.bf16.mxu0 0
  %170 = vmatpush1.bf16.msra.mxu0 %v149
  %171 = vmatprep.subr.bf16.mxu0 0
  %172 = vmatpush1.bf16.msra.mxu0 %v150
  %173 = vmatprep.subr.bf16.mxu0 0
  %174 = vmatpush1.bf16.msra.mxu0 %v151
  %175 = vmatprep.subr.bf16.mxu0 0
  %176 = vmatpush1.bf16.msra.mxu0 %v152
  %177 = vmatprep.subr.bf16.mxu0 0
  %178 = vmatpush1.bf16.msra.mxu0 0
  %179 = vmatprep.subr.bf16.mxu0 0
  %180 = vmatpush1.bf16.msra.mxu0 0
  %181 = vmatprep.subr.bf16.mxu0 0
  %182 = vmatpush1.bf16.msra.mxu0 0
  %183 = vmatprep.subr.bf16.mxu0 0
  %184 = vmatpush1.bf16.msra.mxu0 0
  %185 = vmatprep.subr.bf16.mxu0 0
  %186 = vmatpush1.bf16.msra.mxu0 0
  %187 = vmatprep.subr.bf16.mxu0 0
  %188 = vmatpush1.bf16.msra.mxu0 0
  %189 = vmatprep.subr.bf16.mxu0 0
  %190 = vmatpush1.bf16.msra.mxu0 0
  %191 = vmatprep.subr.bf16.mxu0 0
  %192 = vmatpush1.bf16.msra.mxu0 0
  %193 = vmatprep.mubr.bf16.mxu0 0
  %194 = vmatmul.mubr.bf16.gmra.mrb[0].mxu0 %v89
  %v195 = vpop.f32.mrb[0].mxu0
  %v196 = vadd.f32 %v111, %v195
  %v197 = vpop.f32.mrb[0].mxu0
  %v198 = vpop.f32.mrb[0].mxu0
  %v199 = vpop.f32.mrb[0].mxu0
  %200 = vdwg.mxu0
  %v201 = vmul.f32 %v196, 0.01
  %v202 = vmax.f32 %v196, %v201
  %v203 = vpack.c.bf16 %v202, %v202
  %v204 = vld [vmem:[%s5] sm:$0xf]
  %v205 = vld [vmem:[%s5 + $0x4] sm:$0xf]
  %v206 = vld [vmem:[%s5 + $0x8] sm:$0xf]
  %v207 = vld [vmem:[%s5 + $0xc] sm:$0xf]
  %v208 = vld [vmem:[%s5 + $0x10] sm:$0xf]
  %v209 = vld [vmem:[%s5 + $0x14] sm:$0xf]
  %v210 = vld [vmem:[%s5 + $0x18] sm:$0xf]
  %v211 = vld [vmem:[%s5 + $0x1c] sm:$0xf]
  %v212 = vld [vmem:[%s5 + $0x20] sm:$0xf]
  %v213 = vld [vmem:[%s5 + $0x24] sm:$0xf]
  %v214 = vld [vmem:[%s5 + $0x28] sm:$0xf]
  %v215 = vld [vmem:[%s5 + $0x2c] sm:$0xf]
  %v216 = vld [vmem:[%s5 + $0x30] sm:$0xf]
  %v217 = vld [vmem:[%s5 + $0x34] sm:$0xf]
  %v218 = vld [vmem:[%s5 + $0x38] sm:$0xf]
  %v219 = vld [vmem:[%s5 + $0x3c] sm:$0xf]
  %v220 = vld [vmem:[%s6] sm:$0x1]
  %v222 = vlaneseq
  %v223 = vshrl.u32 %v222, 7
  %v224 = vsub.s32 0, %v223
  %v225 = vrot.slane %v220, %v224
  %v243 = vunpack.c.l.b16 %v204
  %v244 = vunpack.c.l.b16 %v205
  %v245 = vunpack.c.l.b16 %v206
  %v246 = vunpack.c.l.b16 %v207
  %v247 = vunpack.c.l.b16 %v208
  %v248 = vunpack.c.l.b16 %v209
  %v249 = vunpack.c.l.b16 %v210
  %v250 = vunpack.c.l.b16 %v211
  %v251 = vunpack.c.l.b16 %v212
  %v252 = vunpack.c.l.b16 %v213
  %v253 = vunpack.c.l.b16 %v214
  %v254 = vunpack.c.l.b16 %v215
  %v255 = vunpack.c.l.b16 %v216
  %v256 = vunpack.c.l.b16 %v217
  %v257 = vunpack.c.l.b16 %v218
  %v258 = vunpack.c.l.b16 %v219
  %v259 = vpack.c.b16 %v244, %v243
  %v260 = vpack.c.b16 %v246, %v245
  %v261 = vpack.c.b16 %v248, %v247
  %v262 = vpack.c.b16 %v250, %v249
  %v263 = vpack.c.b16 %v252, %v251
  %v264 = vpack.c.b16 %v254, %v253
  %v265 = vpack.c.b16 %v256, %v255
  %v266 = vpack.c.b16 %v258, %v257
  %275 = vmatprep.subr.bf16.mxu0 0
  %276 = vmatpush1.bf16.msra.mxu0 %v259
  %277 = vmatprep.subr.bf16.mxu0 0
  %278 = vmatpush1.bf16.msra.mxu0 %v260
  %279 = vmatprep.subr.bf16.mxu0 0
  %280 = vmatpush1.bf16.msra.mxu0 %v261
  %281 = vmatprep.subr.bf16.mxu0 0
  %282 = vmatpush1.bf16.msra.mxu0 %v262
  %283 = vmatprep.subr.bf16.mxu0 0
  %284 = vmatpush1.bf16.msra.mxu0 %v263
  %285 = vmatprep.subr.bf16.mxu0 0
  %286 = vmatpush1.bf16.msra.mxu0 %v264
  %287 = vmatprep.subr.bf16.mxu0 0
  %288 = vmatpush1.bf16.msra.mxu0 %v265
  %289 = vmatprep.subr.bf16.mxu0 0
  %290 = vmatpush1.bf16.msra.mxu0 %v266
  %291 = vmatprep.subr.bf16.mxu0 0
  %292 = vmatpush1.bf16.msra.mxu0 0
  %293 = vmatprep.subr.bf16.mxu0 0
  %294 = vmatpush1.bf16.msra.mxu0 0
  %295 = vmatprep.subr.bf16.mxu0 0
  %296 = vmatpush1.bf16.msra.mxu0 0
  %297 = vmatprep.subr.bf16.mxu0 0
  %298 = vmatpush1.bf16.msra.mxu0 0
  %299 = vmatprep.subr.bf16.mxu0 0
  %300 = vmatpush1.bf16.msra.mxu0 0
  %301 = vmatprep.subr.bf16.mxu0 0
  %302 = vmatpush1.bf16.msra.mxu0 0
  %303 = vmatprep.subr.bf16.mxu0 0
  %304 = vmatpush1.bf16.msra.mxu0 0
  %305 = vmatprep.subr.bf16.mxu0 0
  %306 = vmatpush1.bf16.msra.mxu0 0
  %307 = vmatprep.mubr.bf16.mxu0 0
  %308 = vmatmul.mubr.bf16.gmra.mrb[0].mxu0 %v203
  %v309 = vpop.f32.mrb[0].mxu0
  %v310 = vadd.f32 %v225, %v309
  %v311 = vpop.f32.mrb[0].mxu0
  %v312 = vpop.f32.mrb[0].mxu0
  %v313 = vpop.f32.mrb[0].mxu0
  %314 = vdwg.mxu0
  %v315 = vsub.f32 0.0, %v310
  %v316 = vmul.f32 %v315, 1.442695
  %v317 = vpow.pop %v316
  %v318 = vadd.f32 %v317, 1.0
  %v319 = vrcp.pop %v318
  %320 = vst [vmem:[%s7] sm:$0xff] %v319
  // Predicated region
  $region30: #{actor_forward.1} parent=0 // pred_check
    _
  $region31: #{actor_forward.1} parent=0 // pred_check_branch
    %322 = sbr.rel (0) target = $region33
  $region32: #{actor_forward.1} parent=0 // pred_region
    _
  $region33: #{actor_forward.1} parent=0 // pred_fallthru
    _
  // Predicated region
  $region34: #{actor_forward.1} parent=0 // pred_check
    _
  $region35: #{actor_forward.1} parent=0 // pred_check_branch
    %324 = sbr.rel (0) target = $region37
  $region36: #{actor_forward.1} parent=0 // pred_region
    _
  $region37: #{actor_forward.1} parent=0 // pred_fallthru
    _

</llo_original>
